<compile_context>
chip_gen: v5e
topology: v5e:2x2
jax: 0.10.0
libtpu: 0.0.40
codegen_flags: <defaults>
</compile_context>

<pallas_src>
import functools
import math

import jax
import jax.numpy as jnp
from jax.experimental import pallas as pl
from jax.experimental.pallas import tpu as pltpu


def _onehot_kernel(tgt_ref, out_ref, *, groups):
    # tgt_ref: (rb, groups) int32 — target lane (within the packed 128-lane row)
    #          of the "1" for each of the `groups` original rows packed into
    #          this packed row, or -1 for "no hit".
    # out_ref: (rb, groups * depth) lane-dense output tile.
    tgt = tgt_ref[...]
    lane = jax.lax.broadcasted_iota(jnp.int32, out_ref.shape, 1)
    hit = lane == tgt[:, 0:1]
    for j in range(1, groups):
        hit = hit | (lane == tgt[:, j:j + 1])
    out_ref[...] = hit.astype(out_ref.dtype)


def one_hot_pallas(indices, depth, *, dtype=jnp.float32,
                   block_bytes=2 * 1024 * 1024):
    """Equivalent of OneHot(depth)(indices): (...,) int -> (..., depth) dtype."""
    indices = jnp.asarray(indices)
    orig_shape = indices.shape
    n = math.prod(orig_shape)

    # Lane packing factor: g consecutive rows share one 128-lane group.
    if depth < 128 and 128 % depth == 0:
        g = 128 // depth
    else:
        g = 1
    width = g * depth
    itemsize = jnp.dtype(dtype).itemsize

    # Packed-row counts, padded so the row tiling is exact (8-sublane multiple).
    n_packed = -(-n // g)
    n_packed8 = -(-n_packed // 8) * 8
    rb = max(8, (block_bytes // (width * itemsize)) // 8 * 8)  # rows per block
    rb = min(rb, n_packed8)
    n_packed_pad = -(-n_packed8 // rb) * rb
    n_pad = n_packed_pad * g

    idx = indices.reshape(-1).astype(jnp.int32)
    valid = (idx >= 0) & (idx < depth)
    if n_pad != n:
        idx = jnp.pad(idx, (0, n_pad - n))
        valid = jnp.pad(valid, (0, n_pad - n))   # padded rows -> all-zero rows
    # Target lane of the "1" inside the packed row; -1 => no hit anywhere.
    offset = (jnp.arange(n_pad, dtype=jnp.int32) % g) * depth
    target = jnp.where(valid, idx + offset, -1).reshape(n_packed_pad, g)

    out = pl.pallas_call(
        functools.partial(_onehot_kernel, groups=g),
        out_shape=jax.ShapeDtypeStruct((n_packed_pad, width), dtype),
        grid=(n_packed_pad // rb,),
        in_specs=[pl.BlockSpec((rb, g), lambda i: (i, 0))],
        out_specs=pl.BlockSpec((rb, width), lambda i: (i, 0)),
        compiler_params=pltpu.CompilerParams(
            dimension_semantics=("parallel",)),
    )(target)

    flat = out.reshape(-1, depth)   # free: same row-major bytes as (N, depth)
    if n_pad != n:
        flat = flat[:n]             # only copies when padding was required
    return flat.reshape(*orig_shape, depth)


if __name__ == "__main__":
    # Small shapes: batch=2, seq=8, depth=32 (Embedding(depth, depth), eye weight).
    key = jax.random.PRNGKey(0)
    batch, seq, depth = 2, 8, 32
    indices = jax.random.randint(key, (batch, seq), 0, depth, dtype=jnp.int32)

    out = one_hot_pallas(indices, depth)
    out = jax.block_until_ready(out)

    # Reference check against plain JAX one-hot (same as torch eye-embedding lookup).
    ref = jax.nn.one_hot(indices, depth, dtype=jnp.float32)
    assert out.shape == (batch, seq, depth), out.shape
    assert out.dtype == jnp.float32, out.dtype
    assert jnp.array_equal(out, ref), "mismatch vs reference one-hot"

    print("KERNEL_OK")
</pallas_src>

<mosaic_0001>
module attributes {stable_mosaic.version = 11 : i64} {
  func.func @_onehot_kernel(%arg0: i32, %arg1: memref<8x4xi32, #tpu.memory_space<vmem>>, %arg2: memref<8x128xf32, #tpu.memory_space<vmem>>) attributes {dimension_semantics = [#tpu.dimension_semantics<parallel>], iteration_bounds = array<i64: 1>, scalar_prefetch = 0 : i64, scratch_operands = 0 : i64, tpu.core_type = #tpu.core_type<tc>, window_params = [{transform_indices = @transform_0, window_bounds = array<i64: 8, 4>}, {transform_indices = @transform_1, window_bounds = array<i64: 8, 128>}]} {
    %c0 = arith.constant 0 : index
    %c0_0 = arith.constant 0 : index
    %0 = vector.load %arg1[%c0, %c0_0] : memref<8x4xi32, #tpu.memory_space<vmem>>, vector<8x4xi32>
    %1 = tpu.iota {dimensions = array<i32: 1>} : vector<8x128xi32>
    %2 = vector.extract_strided_slice %0 {offsets = [0, 0], sizes = [8, 1], strides = [1, 1]} : vector<8x4xi32> to vector<8x1xi32>
    %3 = vector.broadcast %2 : vector<8x1xi32> to vector<8x128xi32>
    %4 = arith.cmpi eq, %1, %3 : vector<8x128xi32>
    %5 = vector.extract_strided_slice %0 {offsets = [0, 1], sizes = [8, 1], strides = [1, 1]} : vector<8x4xi32> to vector<8x1xi32>
    %6 = vector.broadcast %5 : vector<8x1xi32> to vector<8x128xi32>
    %7 = arith.cmpi eq, %1, %6 : vector<8x128xi32>
    %8 = arith.ori %4, %7 : vector<8x128xi1>
    %9 = vector.extract_strided_slice %0 {offsets = [0, 2], sizes = [8, 1], strides = [1, 1]} : vector<8x4xi32> to vector<8x1xi32>
    %10 = vector.broadcast %9 : vector<8x1xi32> to vector<8x128xi32>
    %11 = arith.cmpi eq, %1, %10 : vector<8x128xi32>
    %12 = arith.ori %8, %11 : vector<8x128xi1>
    %13 = vector.extract_strided_slice %0 {offsets = [0, 3], sizes = [8, 1], strides = [1, 1]} : vector<8x4xi32> to vector<8x1xi32>
    %14 = vector.broadcast %13 : vector<8x1xi32> to vector<8x128xi32>
    %15 = arith.cmpi eq, %1, %14 : vector<8x128xi32>
    %16 = arith.ori %12, %15 : vector<8x128xi1>
    %17 = arith.extui %16 : vector<8x128xi1> to vector<8x128xi32>
    %18 = arith.sitofp %17 : vector<8x128xi32> to vector<8x128xf32>
    %c0_1 = arith.constant 0 : index
    %c0_2 = arith.constant 0 : index
    %19 = vector.load %arg2[%c0_1, %c0_2] : memref<8x128xf32, #tpu.memory_space<vmem>>, vector<8x128xf32>
    tpu.vector_store %arg2[%c0_1, %c0_2], %18 {strides = array<i32>} : memref<8x128xf32, #tpu.memory_space<vmem>>, vector<8x128xf32>,
    return
  }
  func.func @transform_0(%arg0: i32) -> (i32, i32) {
    %c0_i32 = arith.constant 0 : i32
    %c0_i32_0 = arith.constant 0 : i32
    return %arg0, %c0_i32 : i32, i32
  }
  func.func @transform_1(%arg0: i32) -> (i32, i32) {
    %c0_i32 = arith.constant 0 : i32
    %c0_i32_0 = arith.constant 0 : i32
    return %arg0, %c0_i32 : i32, i32
  }
}

</mosaic_0001>

<llo_original>
// kernel: tpu_custom_call.1
$region0: #{tpu_custom_call.1}
  #allocation0 [shape = 'u32[]', space=smem, size = 0x4, offset = 0x4, fixed_abs, tag = 'smem constant byte address 0x4 - core index']
  #allocation1 [shape = 'u32[72,128]{1,0:T(1,128)}', space=vmem, size = 0x9000, scoped, tag = 'internal scratch']
  %s0 = inlined_call_operand.vmem [shape: s32[8,4], index: 0, kind: input, shape index: {}]
  %s1 = inlined_call_operand.hbm [shape: f32[8,128], index: 1, kind: output, shape index: {}]
  %s2 = sld [smem:[#allocation0]]
  $region14: #{tpu_custom_call.1} parent=0
    _
  %s4 = ssub.s32 1, %s2
  %s5 = scalar_select 0, %s4, %s2
  $region1: #{tpu_custom_call.1} parent=0
    #allocation2 [shape = 'u8[4096]{0}', space=vmem, size = 0x1000, scoped, tag = 'output window, operand 0, single buffered']
    #allocation3 [shape = 's32[1]{0}', space=sflag, size = 0x4, scoped, tag = 'scoped memory for tpu_custom_call.1']
    %6 = vsyncpa [#allocation3], 0
    // Predicated region
    $region2: #{tpu_custom_call.1} parent=1 // pred_check
      _
    $region3: #{tpu_custom_call.1} parent=1 // pred_check_branch
      %8 = sbr.rel (0) target = $region5
    $region4: #{tpu_custom_call.1} parent=1 // pred_region
      _
    $region5: #{tpu_custom_call.1} parent=1 // pred_fallthru
      _
    %v9 = vld [vmem:[%s0] sm:$0xff]
    %v10 = vlaneseq
    %v11 = vand.u32 %v10, 127
    %12 = vset.pattern.permute.xlu0 0
    %13 = vperm.xlu0 %12, %v9
    %v14 = vpop.permute.xlu0 %13
    %vm15 = vcmp.eq.s32.totalorder %v11, %v14
    %16 = vset.pattern.permute.xlu0 1
    %17 = vperm.xlu0 %16, %v9
    %v18 = vpop.permute.xlu0 %17
    %vm19 = vcmp.eq.s32.totalorder %v11, %v18
    %vm20 = vmor %vm15, %vm19
    %21 = vset.pattern.permute.xlu0 2
    %22 = vperm.xlu0 %21, %v9
    %v23 = vpop.permute.xlu0 %22
    %vm24 = vcmp.eq.s32.totalorder %v11, %v23
    %vm25 = vmor %vm20, %vm24
    %26 = vset.pattern.permute.xlu0 3
    %27 = vperm.xlu0 %26, %v9
    %v28 = vpop.permute.xlu0 %27
    %vm29 = vcmp.eq.s32.totalorder %v11, %v28
    %vm30 = vmor %vm25, %vm29
    %v31 = vsel %vm30, 1, 0
    %v32 = vcvt.s32.f32 %v31
    %33 = vst [vmem:[#allocation2] sm:$0xff] %v32
    // Predicated region
    $region6: #{tpu_custom_call.1} parent=1 // pred_check
      _
    $region7: #{tpu_custom_call.1} parent=1 // pred_check_branch
      %35 = sbr.rel (0) target = $region9
    $region8: #{tpu_custom_call.1} parent=1 // pred_region
      %37 = vsyncadd [#allocation3], 0
      %s39 = sshll.u32 [#allocation2], 4
      %s40 = int_to_ptr.vmem [resolvable:$true] %s39
      %s41 = sshll.u32 %s1, 4
      %s42 = int_to_ptr.hbm [resolvable:$true] %s41
      %44 = dma.vmem_to_hbm [thread:$0]  %s40, 128, %s42, [#allocation3]
    $region9: #{tpu_custom_call.1} parent=1 // pred_fallthru
      _
    // Predicated region
    $region10: #{tpu_custom_call.1} parent=1 // pred_check
      _
    $region11: #{tpu_custom_call.1} parent=1 // pred_check_branch
      %46 = sbr.rel (0) target = $region13
    $region12: #{tpu_custom_call.1} parent=1 // pred_region
      %48 = dma.done [#allocation3], 128
    $region13: #{tpu_custom_call.1} parent=1 // pred_fallthru
      _
    %49 = vsyncpa [#allocation3], 1

</llo_original>
